<compile_context>
chip_gen: v5e
topology: v5e:2x2
jax: 0.10.0
libtpu: 0.0.40
codegen_flags: <defaults>
</compile_context>

<pallas_src>
import jax
import jax.numpy as jnp
from jax.experimental import pallas as pl
from jax.experimental.pallas import tpu as pltpu

C_IN, C_HID, C_OUT, C_OUT_PAD = 20, 32, 3, 8
K, NLAYER = 3, 4
BN_EPS = 1e-5


def _cnn_kernel(x_ref, m_ref, w1_ref, b1_ref, wc_ref, bc_ref, wl_ref, bl_ref,
                out_ref):
    w = x_ref.shape[-1]                       # lane tile width (B_TILE * L)
    m_first = m_ref[0:1, :]                   # (1, w): 0.0 at first position of each sequence
    m_last = m_ref[1:2, :]                    # (1, w): 0.0 at last position of each sequence
    bf16 = jnp.bfloat16

    def prev_tap(h):                          # h[:, l-1] with zero pad at sequence starts
        return pltpu.roll(h, shift=1, axis=1) * m_first

    def next_tap(h):                          # h[:, l+1] with zero pad at sequence ends
        return pltpu.roll(h, shift=w - 1, axis=1) * m_last

    x = x_ref[...]

    # Conv1d(20->32, k=3, pad=1): three accumulating (32,20)x(20,W) bf16 MXU dots.
    # (Dropout is identity at inference; conv1 has no BN/ReLU after it.)
    h = (jnp.dot(w1_ref[0], prev_tap(x).astype(bf16), preferred_element_type=jnp.float32)
         + jnp.dot(w1_ref[1], x.astype(bf16), preferred_element_type=jnp.float32)
         + jnp.dot(w1_ref[2], next_tap(x).astype(bf16), preferred_element_type=jnp.float32)
         + b1_ref[...])

    def taps3(h):
        # (32, w) f32 -> (96, w) bf16 = [h[:, l-1]; h[:, l]; h[:, l+1]] with zero pad.
        return jnp.concatenate([prev_tap(h).astype(bf16),
                                h.astype(bf16),
                                next_tap(h).astype(bf16)], axis=0)

    # 4 x [Conv1d(32->32, k=3, pad=1) + folded eval-BatchNorm1d + ReLU], each a
    # single (32,96)x(96,W) bf16 MXU dot with f32 accumulation.
    for k in range(NLAYER):                   # static unroll
        h = jnp.dot(wc_ref[k], taps3(h), preferred_element_type=jnp.float32) + bc_ref[k]
        h = jnp.maximum(h, 0.0)

    # Linear(32, 3) per position, padded to 8 output sublanes (dense vst).
    out_ref[...] = jnp.dot(wl_ref[...], h.astype(bf16),
                           preferred_element_type=jnp.float32) + bl_ref[...]


def _choose_batch_tile(n, seq_len, max_lanes=8192, min_grid=2):
    """Largest #sequences/tile: divides N, lane-aligned, <= max_lanes; prefer >= min_grid steps."""
    candidates = [b for b in range(1, n + 1)
                  if n % b == 0 and b * seq_len <= max_lanes
                  and (b * seq_len) % 128 == 0]
    if not candidates:
        return n                              # fallback: full extent (block == full array dims)
    multi = [b for b in candidates if (n // b) >= min_grid]
    return max(multi) if multi else max(candidates)


@jax.jit
def cnn_forward(x, p):
    n, cin, seq_len = x.shape
    assert cin == C_IN

    # Pack batch along lanes: (20, N*L). Jit-fused with the pallas_call.
    x_packed = jnp.transpose(x, (1, 0, 2)).reshape(C_IN, n * seq_len)

    b_tile = _choose_batch_tile(n, seq_len)
    tile_w = b_tile * seq_len
    grid = ((n * seq_len) // tile_w,)

    # Per-tile sequence-boundary masks; identical for every tile since tiles
    # start at sequence boundaries -> constant index_map, DMA'd once.
    pos = jnp.arange(tile_w, dtype=jnp.int32) % seq_len
    masks = jnp.stack([pos != 0, pos != seq_len - 1]).astype(jnp.float32)   # (2, tile_w)

    out = pl.pallas_call(
        _cnn_kernel,
        out_shape=jax.ShapeDtypeStruct((C_OUT_PAD, n * seq_len), jnp.float32),
        grid=grid,
        in_specs=[
            pl.BlockSpec((C_IN, tile_w), lambda i: (0, i)),                  # packed x (f32)
            pl.BlockSpec((2, tile_w), lambda i: (0, 0)),                     # boundary masks (f32)
            pl.BlockSpec((K, C_HID, C_IN), lambda i: (0, 0, 0)),             # conv1 per-tap weights (bf16)
            pl.BlockSpec((C_HID, 1), lambda i: (0, 0)),                      # conv1 bias (f32)
            pl.BlockSpec((NLAYER, C_HID, K * C_HID), lambda i: (0, 0, 0)),   # hidden fused taps (bf16, BN folded)
            pl.BlockSpec((NLAYER, C_HID, 1), lambda i: (0, 0, 0)),           # hidden bias (f32, BN folded)
            pl.BlockSpec((C_OUT_PAD, C_HID), lambda i: (0, 0)),              # linear weight, padded to 8 rows (bf16)
            pl.BlockSpec((C_OUT_PAD, 1), lambda i: (0, 0)),                  # linear bias, padded (f32)
        ],
        out_specs=pl.BlockSpec((C_OUT_PAD, tile_w), lambda i: (0, i)),       # lane-/sublane-dense output
        compiler_params=pltpu.CompilerParams(
            dimension_semantics=("parallel",),
            vmem_limit_bytes=48 * 1024 * 1024),
    )(x_packed, masks, p["w1"], p["b1"], p["wc"], p["bc"], p["wl"], p["bl"])

    out = out[:C_OUT].reshape(C_OUT, n, seq_len)
    return jnp.transpose(out, (1, 0, 2))                                     # (N, 3, L)


def make_params(key):
    ks = jax.random.split(key, 10)
    raw = {
        "conv1_w": jax.random.normal(ks[0], (C_HID, C_IN, K), jnp.float32) * 0.1,
        "conv1_b": jax.random.normal(ks[1], (C_HID,), jnp.float32) * 0.1,
        "conv_w": jax.random.normal(ks[2], (NLAYER, C_HID, C_HID, K), jnp.float32) * 0.1,
        "conv_b": jax.random.normal(ks[3], (NLAYER, C_HID), jnp.float32) * 0.1,
        "bn_gamma": 1.0 + 0.1 * jax.random.normal(ks[4], (NLAYER, C_HID), jnp.float32),
        "bn_beta": 0.1 * jax.random.normal(ks[5], (NLAYER, C_HID), jnp.float32),
        "bn_mean": 0.1 * jax.random.normal(ks[6], (NLAYER, C_HID), jnp.float32),
        "bn_var": jax.random.uniform(ks[7], (NLAYER, C_HID), jnp.float32, 0.5, 1.5),
        "lin_w": jax.random.normal(ks[8], (C_OUT, C_HID), jnp.float32) * 0.1,
        "lin_b": jax.random.normal(ks[9], (C_OUT,), jnp.float32) * 0.1,
    }

    bn_scale = raw["bn_gamma"] / jnp.sqrt(raw["bn_var"] + BN_EPS)      # (4, 32)
    bn_shift = raw["bn_beta"] - raw["bn_mean"] * bn_scale              # (4, 32)

    # Conv1 per-tap weights: (3, 32, 20); tap 0 multiplies the previous position.
    w1 = jnp.transpose(raw["conv1_w"], (2, 0, 1))                      # (3, 32, 20)

    # Hidden convs: taps stacked to (4, 32, 96) = [t_prev | t_center | t_next]
    # along K, with eval-BN folded into weight + bias.
    wc = jnp.transpose(raw["conv_w"], (0, 1, 3, 2)).reshape(NLAYER, C_HID, K * C_HID)
    wc = wc * bn_scale[:, :, None]                                     # w' = scale * w
    bc = (bn_scale * raw["conv_b"] + bn_shift)[:, :, None]             # b' = scale*b + shift

    # Linear head padded 3 -> 8 output rows for a sublane-dense store.
    wl = jnp.zeros((C_OUT_PAD, C_HID), jnp.float32).at[:C_OUT].set(raw["lin_w"])
    bl = jnp.zeros((C_OUT_PAD, 1), jnp.float32).at[:C_OUT, 0].set(raw["lin_b"])

    kernel_params = {
        "w1": w1.astype(jnp.bfloat16),                                 # (3, 32, 20) bf16
        "b1": raw["conv1_b"][:, None],                                 # (32, 1) f32
        "wc": wc.astype(jnp.bfloat16),                                 # (4, 32, 96) bf16
        "bc": bc,                                                      # (4, 32, 1) f32
        "wl": wl.astype(jnp.bfloat16),                                 # (8, 32) bf16
        "bl": bl,                                                      # (8, 1) f32
    }
    return raw, kernel_params


def cnn_reference(x, raw):
    """Pure-JAX f32 reference matching the PyTorch module in eval mode."""
    def conv1d(h, w, b):
        y = jax.lax.conv_general_dilated(
            h, w, window_strides=(1,), padding=[(1, 1)],
            dimension_numbers=("NCH", "OIH", "NCH"))
        return y + b[None, :, None]

    h = conv1d(x, raw["conv1_w"], raw["conv1_b"])                      # dropout = identity
    for k in range(NLAYER):
        h = conv1d(h, raw["conv_w"][k], raw["conv_b"][k])
        h = (h - raw["bn_mean"][k][None, :, None]) / jnp.sqrt(
            raw["bn_var"][k][None, :, None] + BN_EPS)
        h = h * raw["bn_gamma"][k][None, :, None] + raw["bn_beta"][k][None, :, None]
        h = jnp.maximum(h, 0.0)
    pred = jnp.einsum("ncl,oc->nol", h, raw["lin_w"]) + raw["lin_b"][None, :, None]
    return pred


if __name__ == "__main__":
    key = jax.random.PRNGKey(0)
    k_param, k_x = jax.random.split(key)
    raw, params = make_params(k_param)

    N, L = 2, 128
    x = jax.random.normal(k_x, (N, C_IN, L), jnp.float32)

    out = jax.block_until_ready(cnn_forward(x, params))
    ref = cnn_reference(x, raw)

    assert out.shape == (N, C_OUT, L)
    err = float(jnp.max(jnp.abs(out - ref)))
    # bf16 matmul operands across 6 stacked layers: tolerance scaled to the
    # f32 reference magnitude (review flagged 1e-3 as too tight for bf16).
    tol = 2e-2 + 2e-2 * float(jnp.max(jnp.abs(ref)))
    assert err < tol, (err, tol)

    print("KERNEL_OK")
</pallas_src>

<mosaic_0001>
module attributes {stable_mosaic.version = 11 : i64} {
  func.func @_cnn_kernel(%arg0: i32, %arg1: memref<20x128xf32, #tpu.memory_space<vmem>>, %arg2: memref<2x128xf32, #tpu.memory_space<vmem>>, %arg3: memref<3x32x20xbf16, #tpu.memory_space<vmem>>, %arg4: memref<32x1xf32, #tpu.memory_space<vmem>>, %arg5: memref<4x32x96xbf16, #tpu.memory_space<vmem>>, %arg6: memref<4x32x1xf32, #tpu.memory_space<vmem>>, %arg7: memref<8x32xbf16, #tpu.memory_space<vmem>>, %arg8: memref<8x1xf32, #tpu.memory_space<vmem>>, %arg9: memref<8x128xf32, #tpu.memory_space<vmem>>) attributes {dimension_semantics = [#tpu.dimension_semantics<parallel>], iteration_bounds = array<i64: 2>, scalar_prefetch = 0 : i64, scratch_operands = 0 : i64, tpu.core_type = #tpu.core_type<tc>, window_params = [{transform_indices = @transform_0, window_bounds = array<i64: 20, 128>}, {pipeline_mode = #tpu.pipeline_mode<synchronous>, transform_indices = @transform_1, window_bounds = array<i64: 2, 128>}, {pipeline_mode = #tpu.pipeline_mode<synchronous>, transform_indices = @transform_2, window_bounds = array<i64: 3, 32, 20>}, {pipeline_mode = #tpu.pipeline_mode<synchronous>, transform_indices = @transform_3, window_bounds = array<i64: 32, 1>}, {pipeline_mode = #tpu.pipeline_mode<synchronous>, transform_indices = @transform_4, window_bounds = array<i64: 4, 32, 96>}, {pipeline_mode = #tpu.pipeline_mode<synchronous>, transform_indices = @transform_5, window_bounds = array<i64: 4, 32, 1>}, {pipeline_mode = #tpu.pipeline_mode<synchronous>, transform_indices = @transform_6, window_bounds = array<i64: 8, 32>}, {pipeline_mode = #tpu.pipeline_mode<synchronous>, transform_indices = @transform_7, window_bounds = array<i64: 8, 1>}, {transform_indices = @transform_8, window_bounds = array<i64: 8, 128>}]} {
    %c0 = arith.constant 0 : index
    %c0_0 = arith.constant 0 : index
    %0 = vector.load %arg2[%c0, %c0_0] : memref<2x128xf32, #tpu.memory_space<vmem>>, vector<1x128xf32>
    %c1 = arith.constant 1 : index
    %c0_1 = arith.constant 0 : index
    %1 = vector.load %arg2[%c1, %c0_1] : memref<2x128xf32, #tpu.memory_space<vmem>>, vector<1x128xf32>
    %c0_2 = arith.constant 0 : index
    %c0_3 = arith.constant 0 : index
    %2 = vector.load %arg1[%c0_2, %c0_3] : memref<20x128xf32, #tpu.memory_space<vmem>>, vector<20x128xf32>
    %c0_4 = arith.constant 0 : index
    %c0_5 = arith.constant 0 : index
    %c0_6 = arith.constant 0 : index
    %3 = vector.load %arg3[%c0_4, %c0_5, %c0_6] : memref<3x32x20xbf16, #tpu.memory_space<vmem>>, vector<1x32x20xbf16>
    %4 = vector.shape_cast %3 : vector<1x32x20xbf16> to vector<32x20xbf16>
    %c1_i32 = arith.constant 1 : i32
    %5 = tpu.dynamic_rotate %2 by %c1_i32 dim 1 : vector<20x128xf32>, i32 -> vector<20x128xf32>
    %6 = vector.broadcast %0 : vector<1x128xf32> to vector<20x128xf32>
    %7 = arith.mulf %5, %6 : vector<20x128xf32>
    %8 = arith.truncf %7 : vector<20x128xf32> to vector<20x128xbf16>
    %cst = arith.constant dense<0.000000e+00> : vector<32x128xf32>
    %9 = tpu.matmul %4, %8, %cst {dimension_numbers = #tpu.dot_dimension_numbers<[1], [0], [0], [1], [0, 0, 1, 1], [], []>} : vector<32x20xbf16>, vector<20x128xbf16>, vector<32x128xf32> -> vector<32x128xf32>
    %c1_7 = arith.constant 1 : index
    %c0_8 = arith.constant 0 : index
    %c0_9 = arith.constant 0 : index
    %10 = vector.load %arg3[%c1_7, %c0_8, %c0_9] : memref<3x32x20xbf16, #tpu.memory_space<vmem>>, vector<1x32x20xbf16>
    %11 = vector.shape_cast %10 : vector<1x32x20xbf16> to vector<32x20xbf16>
    %12 = arith.truncf %2 : vector<20x128xf32> to vector<20x128xbf16>
    %cst_10 = arith.constant dense<0.000000e+00> : vector<32x128xf32>
    %13 = tpu.matmul %11, %12, %cst_10 {dimension_numbers = #tpu.dot_dimension_numbers<[1], [0], [0], [1], [0, 0, 1, 1], [], []>} : vector<32x20xbf16>, vector<20x128xbf16>, vector<32x128xf32> -> vector<32x128xf32>
    %14 = arith.addf %9, %13 : vector<32x128xf32>
    %c2 = arith.constant 2 : index
    %c0_11 = arith.constant 0 : index
    %c0_12 = arith.constant 0 : index
    %15 = vector.load %arg3[%c2, %c0_11, %c0_12] : memref<3x32x20xbf16, #tpu.memory_space<vmem>>, vector<1x32x20xbf16>
    %16 = vector.shape_cast %15 : vector<1x32x20xbf16> to vector<32x20xbf16>
    %c127_i32 = arith.constant 127 : i32
    %17 = tpu.dynamic_rotate %2 by %c127_i32 dim 1 : vector<20x128xf32>, i32 -> vector<20x128xf32>
    %18 = vector.broadcast %1 : vector<1x128xf32> to vector<20x128xf32>
    %19 = arith.mulf %17, %18 : vector<20x128xf32>
    %20 = arith.truncf %19 : vector<20x128xf32> to vector<20x128xbf16>
    %cst_13 = arith.constant dense<0.000000e+00> : vector<32x128xf32>
    %21 = tpu.matmul %16, %20, %cst_13 {dimension_numbers = #tpu.dot_dimension_numbers<[1], [0], [0], [1], [0, 0, 1, 1], [], []>} : vector<32x20xbf16>, vector<20x128xbf16>, vector<32x128xf32> -> vector<32x128xf32>
    %22 = arith.addf %14, %21 : vector<32x128xf32>
    %c0_14 = arith.constant 0 : index
    %c0_15 = arith.constant 0 : index
    %23 = vector.load %arg4[%c0_14, %c0_15] : memref<32x1xf32, #tpu.memory_space<vmem>>, vector<32x1xf32>
    %24 = vector.broadcast %23 : vector<32x1xf32> to vector<32x128xf32>
    %25 = arith.addf %22, %24 : vector<32x128xf32>
    %c0_16 = arith.constant 0 : index
    %c0_17 = arith.constant 0 : index
    %c0_18 = arith.constant 0 : index
    %26 = vector.load %arg5[%c0_16, %c0_17, %c0_18] : memref<4x32x96xbf16, #tpu.memory_space<vmem>>, vector<1x32x96xbf16>
    %27 = vector.shape_cast %26 : vector<1x32x96xbf16> to vector<32x96xbf16>
    %c1_i32_19 = arith.constant 1 : i32
    %28 = tpu.dynamic_rotate %25 by %c1_i32_19 dim 1 : vector<32x128xf32>, i32 -> vector<32x128xf32>
    %29 = vector.broadcast %0 : vector<1x128xf32> to vector<32x128xf32>
    %30 = arith.mulf %28, %29 : vector<32x128xf32>
    %31 = arith.truncf %30 : vector<32x128xf32> to vector<32x128xbf16>
    %32 = arith.truncf %25 : vector<32x128xf32> to vector<32x128xbf16>
    %c127_i32_20 = arith.constant 127 : i32
    %33 = tpu.dynamic_rotate %25 by %c127_i32_20 dim 1 : vector<32x128xf32>, i32 -> vector<32x128xf32>
    %34 = vector.broadcast %1 : vector<1x128xf32> to vector<32x128xf32>
    %35 = arith.mulf %33, %34 : vector<32x128xf32>
    %36 = arith.truncf %35 : vector<32x128xf32> to vector<32x128xbf16>
    %37 = tpu.concatenate %31, %32, %36 in 0 : vector<32x128xbf16>, vector<32x128xbf16>, vector<32x128xbf16> -> vector<96x128xbf16>
    %cst_21 = arith.constant dense<0.000000e+00> : vector<32x128xf32>
    %38 = tpu.matmul %27, %37, %cst_21 {dimension_numbers = #tpu.dot_dimension_numbers<[1], [0], [0], [1], [0, 0, 1, 1], [], []>} : vector<32x96xbf16>, vector<96x128xbf16>, vector<32x128xf32> -> vector<32x128xf32>
    %c0_22 = arith.constant 0 : index
    %c0_23 = arith.constant 0 : index
    %c0_24 = arith.constant 0 : index
    %39 = vector.load %arg6[%c0_22, %c0_23, %c0_24] : memref<4x32x1xf32, #tpu.memory_space<vmem>>, vector<1x32x1xf32>
    %40 = vector.shape_cast %39 : vector<1x32x1xf32> to vector<32x1xf32>
    %41 = vector.broadcast %40 : vector<32x1xf32> to vector<32x128xf32>
    %42 = arith.addf %38, %41 : vector<32x128xf32>
    %cst_25 = arith.constant 0.000000e+00 : f32
    %43 = vector.broadcast %cst_25 : f32 to vector<32x128xf32>
    %44 = arith.maximumf %42, %43 : vector<32x128xf32>
    %c1_26 = arith.constant 1 : index
    %c0_27 = arith.constant 0 : index
    %c0_28 = arith.constant 0 : index
    %45 = vector.load %arg5[%c1_26, %c0_27, %c0_28] : memref<4x32x96xbf16, #tpu.memory_space<vmem>>, vector<1x32x96xbf16>
    %46 = vector.shape_cast %45 : vector<1x32x96xbf16> to vector<32x96xbf16>
    %c1_i32_29 = arith.constant 1 : i32
    %47 = tpu.dynamic_rotate %44 by %c1_i32_29 dim 1 : vector<32x128xf32>, i32 -> vector<32x128xf32>
    %48 = vector.broadcast %0 : vector<1x128xf32> to vector<32x128xf32>
    %49 = arith.mulf %47, %48 : vector<32x128xf32>
    %50 = arith.truncf %49 : vector<32x128xf32> to vector<32x128xbf16>
    %51 = arith.truncf %44 : vector<32x128xf32> to vector<32x128xbf16>
    %c127_i32_30 = arith.constant 127 : i32
    %52 = tpu.dynamic_rotate %44 by %c127_i32_30 dim 1 : vector<32x128xf32>, i32 -> vector<32x128xf32>
    %53 = vector.broadcast %1 : vector<1x128xf32> to vector<32x128xf32>
    %54 = arith.mulf %52, %53 : vector<32x128xf32>
    %55 = arith.truncf %54 : vector<32x128xf32> to vector<32x128xbf16>
    %56 = tpu.concatenate %50, %51, %55 in 0 : vector<32x128xbf16>, vector<32x128xbf16>, vector<32x128xbf16> -> vector<96x128xbf16>
    %cst_31 = arith.constant dense<0.000000e+00> : vector<32x128xf32>
    %57 = tpu.matmul %46, %56, %cst_31 {dimension_numbers = #tpu.dot_dimension_numbers<[1], [0], [0], [1], [0, 0, 1, 1], [], []>} : vector<32x96xbf16>, vector<96x128xbf16>, vector<32x128xf32> -> vector<32x128xf32>
    %c1_32 = arith.constant 1 : index
    %c0_33 = arith.constant 0 : index
    %c0_34 = arith.constant 0 : index
    %58 = vector.load %arg6[%c1_32, %c0_33, %c0_34] : memref<4x32x1xf32, #tpu.memory_space<vmem>>, vector<1x32x1xf32>
    %59 = vector.shape_cast %58 : vector<1x32x1xf32> to vector<32x1xf32>
    %60 = vector.broadcast %59 : vector<32x1xf32> to vector<32x128xf32>
    %61 = arith.addf %57, %60 : vector<32x128xf32>
    %cst_35 = arith.constant 0.000000e+00 : f32
    %62 = vector.broadcast %cst_35 : f32 to vector<32x128xf32>
    %63 = arith.maximumf %61, %62 : vector<32x128xf32>
    %c2_36 = arith.constant 2 : index
    %c0_37 = arith.constant 0 : index
    %c0_38 = arith.constant 0 : index
    %64 = vector.load %arg5[%c2_36, %c0_37, %c0_38] : memref<4x32x96xbf16, #tpu.memory_space<vmem>>, vector<1x32x96xbf16>
    %65 = vector.shape_cast %64 : vector<1x32x96xbf16> to vector<32x96xbf16>
    %c1_i32_39 = arith.constant 1 : i32
    %66 = tpu.dynamic_rotate %63 by %c1_i32_39 dim 1 : vector<32x128xf32>, i32 -> vector<32x128xf32>
    %67 = vector.broadcast %0 : vector<1x128xf32> to vector<32x128xf32>
    %68 = arith.mulf %66, %67 : vector<32x128xf32>
    %69 = arith.truncf %68 : vector<32x128xf32> to vector<32x128xbf16>
    %70 = arith.truncf %63 : vector<32x128xf32> to vector<32x128xbf16>
    %c127_i32_40 = arith.constant 127 : i32
    %71 = tpu.dynamic_rotate %63 by %c127_i32_40 dim 1 : vector<32x128xf32>, i32 -> vector<32x128xf32>
    %72 = vector.broadcast %1 : vector<1x128xf32> to vector<32x128xf32>
    %73 = arith.mulf %71, %72 : vector<32x128xf32>
    %74 = arith.truncf %73 : vector<32x128xf32> to vector<32x128xbf16>
    %75 = tpu.concatenate %69, %70, %74 in 0 : vector<32x128xbf16>, vector<32x128xbf16>, vector<32x128xbf16> -> vector<96x128xbf16>
    %cst_41 = arith.constant dense<0.000000e+00> : vector<32x128xf32>
    %76 = tpu.matmul %65, %75, %cst_41 {dimension_numbers = #tpu.dot_dimension_numbers<[1], [0], [0], [1], [0, 0, 1, 1], [], []>} : vector<32x96xbf16>, vector<96x128xbf16>, vector<32x128xf32> -> vector<32x128xf32>
    %c2_42 = arith.constant 2 : index
    %c0_43 = arith.constant 0 : index
    %c0_44 = arith.constant 0 : index
    %77 = vector.load %arg6[%c2_42, %c0_43, %c0_44] : memref<4x32x1xf32, #tpu.memory_space<vmem>>, vector<1x32x1xf32>
    %78 = vector.shape_cast %77 : vector<1x32x1xf32> to vector<32x1xf32>
    %79 = vector.broadcast %78 : vector<32x1xf32> to vector<32x128xf32>
    %80 = arith.addf %76, %79 : vector<32x128xf32>
    %cst_45 = arith.constant 0.000000e+00 : f32
    %81 = vector.broadcast %cst_45 : f32 to vector<32x128xf32>
    %82 = arith.maximumf %80, %81 : vector<32x128xf32>
    %c3 = arith.constant 3 : index
    %c0_46 = arith.constant 0 : index
    %c0_47 = arith.constant 0 : index
    %83 = vector.load %arg5[%c3, %c0_46, %c0_47] : memref<4x32x96xbf16, #tpu.memory_space<vmem>>, vector<1x32x96xbf16>
    %84 = vector.shape_cast %83 : vector<1x32x96xbf16> to vector<32x96xbf16>
    %c1_i32_48 = arith.constant 1 : i32
    %85 = tpu.dynamic_rotate %82 by %c1_i32_48 dim 1 : vector<32x128xf32>, i32 -> vector<32x128xf32>
    %86 = vector.broadcast %0 : vector<1x128xf32> to vector<32x128xf32>
    %87 = arith.mulf %85, %86 : vector<32x128xf32>
    %88 = arith.truncf %87 : vector<32x128xf32> to vector<32x128xbf16>
    %89 = arith.truncf %82 : vector<32x128xf32> to vector<32x128xbf16>
    %c127_i32_49 = arith.constant 127 : i32
    %90 = tpu.dynamic_rotate %82 by %c127_i32_49 dim 1 : vector<32x128xf32>, i32 -> vector<32x128xf32>
    %91 = vector.broadcast %1 : vector<1x128xf32> to vector<32x128xf32>
    %92 = arith.mulf %90, %91 : vector<32x128xf32>
    %93 = arith.truncf %92 : vector<32x128xf32> to vector<32x128xbf16>
    %94 = tpu.concatenate %88, %89, %93 in 0 : vector<32x128xbf16>, vector<32x128xbf16>, vector<32x128xbf16> -> vector<96x128xbf16>
    %cst_50 = arith.constant dense<0.000000e+00> : vector<32x128xf32>
    %95 = tpu.matmul %84, %94, %cst_50 {dimension_numbers = #tpu.dot_dimension_numbers<[1], [0], [0], [1], [0, 0, 1, 1], [], []>} : vector<32x96xbf16>, vector<96x128xbf16>, vector<32x128xf32> -> vector<32x128xf32>
    %c3_51 = arith.constant 3 : index
    %c0_52 = arith.constant 0 : index
    %c0_53 = arith.constant 0 : index
    %96 = vector.load %arg6[%c3_51, %c0_52, %c0_53] : memref<4x32x1xf32, #tpu.memory_space<vmem>>, vector<1x32x1xf32>
    %97 = vector.shape_cast %96 : vector<1x32x1xf32> to vector<32x1xf32>
    %98 = vector.broadcast %97 : vector<32x1xf32> to vector<32x128xf32>
    %99 = arith.addf %95, %98 : vector<32x128xf32>
    %cst_54 = arith.constant 0.000000e+00 : f32
    %100 = vector.broadcast %cst_54 : f32 to vector<32x128xf32>
    %101 = arith.maximumf %99, %100 : vector<32x128xf32>
    %c0_55 = arith.constant 0 : index
    %c0_56 = arith.constant 0 : index
    %102 = vector.load %arg7[%c0_55, %c0_56] : memref<8x32xbf16, #tpu.memory_space<vmem>>, vector<8x32xbf16>
    %103 = arith.truncf %101 : vector<32x128xf32> to vector<32x128xbf16>
    %cst_57 = arith.constant dense<0.000000e+00> : vector<8x128xf32>
    %104 = tpu.matmul %102, %103, %cst_57 {dimension_numbers = #tpu.dot_dimension_numbers<[1], [0], [0], [1], [0, 0, 1, 1], [], []>} : vector<8x32xbf16>, vector<32x128xbf16>, vector<8x128xf32> -> vector<8x128xf32>
    %c0_58 = arith.constant 0 : index
    %c0_59 = arith.constant 0 : index
    %105 = vector.load %arg8[%c0_58, %c0_59] : memref<8x1xf32, #tpu.memory_space<vmem>>, vector<8x1xf32>
    %106 = vector.broadcast %105 : vector<8x1xf32> to vector<8x128xf32>
    %107 = arith.addf %104, %106 : vector<8x128xf32>
    %c0_60 = arith.constant 0 : index
    %c0_61 = arith.constant 0 : index
    %108 = vector.load %arg9[%c0_60, %c0_61] : memref<8x128xf32, #tpu.memory_space<vmem>>, vector<8x128xf32>
    tpu.vector_store %arg9[%c0_60, %c0_61], %107 {strides = array<i32>} : memref<8x128xf32, #tpu.memory_space<vmem>>, vector<8x128xf32>,
    return
  }
  func.func @transform_0(%arg0: i32) -> (i32, i32) {
    %c0_i32 = arith.constant 0 : i32
    %c0_i32_0 = arith.constant 0 : i32
    return %c0_i32, %arg0 : i32, i32
  }
  func.func @transform_1(%arg0: i32) -> (i32, i32) {
    %c0_i32 = arith.constant 0 : i32
    %c0_i32_0 = arith.constant 0 : i32
    %c0_i32_1 = arith.constant 0 : i32
    return %c0_i32, %c0_i32_0 : i32, i32
  }
  func.func @transform_2(%arg0: i32) -> (i32, i32, i32) {
    %c0_i32 = arith.constant 0 : i32
    %c0_i32_0 = arith.constant 0 : i32
    %c0_i32_1 = arith.constant 0 : i32
    %c0_i32_2 = arith.constant 0 : i32
    return %c0_i32, %c0_i32_0, %c0_i32_1 : i32, i32, i32
  }
  func.func @transform_3(%arg0: i32) -> (i32, i32) {
    %c0_i32 = arith.constant 0 : i32
    %c0_i32_0 = arith.constant 0 : i32
    %c0_i32_1 = arith.constant 0 : i32
    return %c0_i32, %c0_i32_0 : i32, i32
  }
  func.func @transform_4(%arg0: i32) -> (i32, i32, i32) {
    %c0_i32 = arith.constant 0 : i32
    %c0_i32_0 = arith.constant 0 : i32
    %c0_i32_1 = arith.constant 0 : i32
    %c0_i32_2 = arith.constant 0 : i32
    return %c0_i32, %c0_i32_0, %c0_i32_1 : i32, i32, i32
  }
  func.func @transform_5(%arg0: i32) -> (i32, i32, i32) {
    %c0_i32 = arith.constant 0 : i32
    %c0_i32_0 = arith.constant 0 : i32
    %c0_i32_1 = arith.constant 0 : i32
    %c0_i32_2 = arith.constant 0 : i32
    return %c0_i32, %c0_i32_0, %c0_i32_1 : i32, i32, i32
  }
  func.func @transform_6(%arg0: i32) -> (i32, i32) {
    %c0_i32 = arith.constant 0 : i32
    %c0_i32_0 = arith.constant 0 : i32
    %c0_i32_1 = arith.constant 0 : i32
    return %c0_i32, %c0_i32_0 : i32, i32
  }
  func.func @transform_7(%arg0: i32) -> (i32, i32) {
    %c0_i32 = arith.constant 0 : i32
    %c0_i32_0 = arith.constant 0 : i32
    %c0_i32_1 = arith.constant 0 : i32
    return %c0_i32, %c0_i32_0 : i32, i32
  }
  func.func @transform_8(%arg0: i32) -> (i32, i32) {
    %c0_i32 = arith.constant 0 : i32
    %c0_i32_0 = arith.constant 0 : i32
    return %c0_i32, %arg0 : i32, i32
  }
}

</mosaic_0001>

<llo_original>
// kernel: cnn_forward.1
$region0: #{cnn_forward.1}
  #allocation0 [shape = 'u32[]', space=smem, size = 0x4, offset = 0x4, fixed_abs, tag = 'smem constant byte address 0x4 - core index']
  #allocation1 [shape = 'u32[72,128]{1,0:T(1,128)}', space=vmem, size = 0x9000, scoped, tag = 'internal scratch']
  %s0 = inlined_call_operand.vmem [shape: f32[20,256], index: 0, kind: input, shape index: {}]
  %s1 = inlined_call_operand.vmem [shape: f32[2,128], index: 1, kind: input, shape index: {}]
  %s2 = inlined_call_operand.vmem [shape: bf16[3,32,20], index: 2, kind: input, shape index: {}]
  %s3 = inlined_call_operand.vmem [shape: f32[32,1], index: 3, kind: input, shape index: {}]
  %s4 = inlined_call_operand.vmem [shape: bf16[4,32,96], index: 4, kind: input, shape index: {}]
  %s5 = inlined_call_operand.vmem [shape: f32[4,32,1], index: 5, kind: input, shape index: {}]
  %s6 = inlined_call_operand.vmem [shape: bf16[8,32], index: 6, kind: input, shape index: {}]
  %s7 = inlined_call_operand.vmem [shape: f32[8,1], index: 7, kind: input, shape index: {}]
  %s8 = inlined_call_operand.vmem [shape: f32[8,256], index: 8, kind: output, shape index: {}]
  %s9 = sld [smem:[#allocation0]]
  $region103: #{cnn_forward.1} parent=0
    _
  %s11 = ssub.s32 1, %s9
  %s12 = scalar_select 0, %s11, %s9
  $region1: #{cnn_forward.1} parent=0
    #allocation2 [shape = 'u8[24576]{0}', space=vmem, size = 0x6000, scoped, tag = 'input window, operand 0']
    loop: start=0, step=1, limit=4
    $region2: #{cnn_forward.1} parent=1 // loop_pre_header
      _
    $region3: #{cnn_forward.1} parent=1 // loop_header
      %s14 = sphi 0, %s18
      %p15 = scmp.ge.s32.totalorder %s14, 4
      %s24 = sphi 0, %s26
      %s27 = sphi 0, %s24
      %s28 = sphi 0, %s27
      %s44 = sphi 0, %s28
      %s48 = sphi 0, %s48
      %s50 = sphi 0, %s48
      %s51 = sphi 0, %s50
      %s65 = sphi 0, %s51
      %s69 = sphi 0, %s69
      %s71 = sphi 0, %s69
      %s72 = sphi 0, %s71
      %s86 = sphi 0, %s72
      %s90 = sphi 0, %s90
      %s92 = sphi 0, %s90
      %s93 = sphi 0, %s92
      %s107 = sphi 0, %s93
      %s111 = sphi 0, %s111
      %s113 = sphi 0, %s111
      %s114 = sphi 0, %s113
      %s128 = sphi 0, %s114
      %s132 = sphi 0, %s132
      %s134 = sphi 0, %s132
      %s135 = sphi 0, %s134
      %s149 = sphi 0, %s135
      %s153 = sphi 0, %s153
      %s155 = sphi 0, %s153
      %s156 = sphi 0, %s155
      %s170 = sphi 0, %s156
      %s174 = sphi 0, %s174
      %s176 = sphi 0, %s174
      %s177 = sphi 0, %s176
      %s191 = sphi 0, %s177
      %s197 = sphi 0, %s199
      %s200 = sphi 0, %s197
      %s201 = sphi 0, %s200
      %s217 = sphi 0, %s201
    $region4: #{cnn_forward.1} parent=1 // loop_header_branch
      %17 = sbr.rel (%p15) target = $region8
    $region5: #{cnn_forward.1} parent=1 // loop_body
      %s19 = ssub.s32 %s14, 1
      %s20 = ssub.s32 %s14, 2
      %s21 = sadd.s32 %s14, 1
      %s22 = ssub.s32 %s14, %s21
      %p23 = scmp.eq.s32.totalorder %s22, 0
      %s25 = sadd.s32 %s24, 1
      %s26 = scalar_select %p23, %s24, %s25
      %p29 = pneg %p23
      %p30 = scmp.eq.s32.totalorder %s14, 1
      %p31 = por %p29, %p30
      %p32 = scmp.ne.s32.totalorder %s24, %s27
      %p33 = scmp.eq.s32.totalorder %s14, 0
      %p34 = por %p32, %p33
      %p35 = scmp.ne.s32.totalorder %s24, %s27
      %p36 = scmp.eq.s32.totalorder %s19, 1
      %p37 = por %p35, %p36
      %p38 = scmp.ne.s32.totalorder %s27, %s28
      %p39 = scmp.eq.s32.totalorder %s19, 0
      %p40 = por %p38, %p39
      %p41 = scmp.ne.s32.totalorder %s27, %s28
      %p42 = scmp.eq.s32.totalorder %s20, 1
      %p43 = por %p41, %p42
      %p45 = scmp.ne.s32.totalorder %s28, %s44
      %p46 = scmp.eq.s32.totalorder %s20, 0
      %p47 = por %p45, %p46
      %s49 = sadd.s32 %s48, 1
      %p52 = scmp.eq.s32.totalorder %s14, 1
      %p53 = scmp.ne.s32.totalorder %s48, %s50
      %p54 = scmp.eq.s32.totalorder %s14, 0
      %p55 = por %p53, %p54
      %p56 = scmp.ne.s32.totalorder %s48, %s50
      %p57 = scmp.eq.s32.totalorder %s19, 1
      %p58 = por %p56, %p57
      %p59 = scmp.ne.s32.totalorder %s50, %s51
      %p60 = scmp.eq.s32.totalorder %s19, 0
      %p61 = por %p59, %p60
      %p62 = scmp.ne.s32.totalorder %s50, %s51
      %p63 = scmp.eq.s32.totalorder %s20, 1
      %p64 = por %p62, %p63
      %p66 = scmp.ne.s32.totalorder %s51, %s65
      %p67 = scmp.eq.s32.totalorder %s20, 0
      %p68 = por %p66, %p67
      %s70 = sadd.s32 %s69, 1
      %p73 = scmp.eq.s32.totalorder %s14, 1
      %p74 = scmp.ne.s32.totalorder %s69, %s71
      %p75 = scmp.eq.s32.totalorder %s14, 0
      %p76 = por %p74, %p75
      %p77 = scmp.ne.s32.totalorder %s69, %s71
      %p78 = scmp.eq.s32.totalorder %s19, 1
      %p79 = por %p77, %p78
      %p80 = scmp.ne.s32.totalorder %s71, %s72
      %p81 = scmp.eq.s32.totalorder %s19, 0
      %p82 = por %p80, %p81
      %p83 = scmp.ne.s32.totalorder %s71, %s72
      %p84 = scmp.eq.s32.totalorder %s20, 1
      %p85 = por %p83, %p84
      %p87 = scmp.ne.s32.totalorder %s72, %s86
      %p88 = scmp.eq.s32.totalorder %s20, 0
      %p89 = por %p87, %p88
      %s91 = sadd.s32 %s90, 1
      %p94 = scmp.eq.s32.totalorder %s14, 1
      %p95 = scmp.ne.s32.totalorder %s90, %s92
      %p96 = scmp.eq.s32.totalorder %s14, 0
      %p97 = por %p95, %p96
      %p98 = scmp.ne.s32.totalorder %s90, %s92
      %p99 = scmp.eq.s32.totalorder %s19, 1
      %p100 = por %p98, %p99
      %p101 = scmp.ne.s32.totalorder %s92, %s93
      %p102 = scmp.eq.s32.totalorder %s19, 0
      %p103 = por %p101, %p102
      %p104 = scmp.ne.s32.totalorder %s92, %s93
      %p105 = scmp.eq.s32.totalorder %s20, 1
      %p106 = por %p104, %p105
      %p108 = scmp.ne.s32.totalorder %s93, %s107
      %p109 = scmp.eq.s32.totalorder %s20, 0
      %p110 = por %p108, %p109
      %s112 = sadd.s32 %s111, 1
      %p115 = scmp.eq.s32.totalorder %s14, 1
      %p116 = scmp.ne.s32.totalorder %s111, %s113
      %p117 = scmp.eq.s32.totalorder %s14, 0
      %p118 = por %p116, %p117
      %p119 = scmp.ne.s32.totalorder %s111, %s113
      %p120 = scmp.eq.s32.totalorder %s19, 1
      %p121 = por %p119, %p120
      %p122 = scmp.ne.s32.totalorder %s113, %s114
      %p123 = scmp.eq.s32.totalorder %s19, 0
      %p124 = por %p122, %p123
      %p125 = scmp.ne.s32.totalorder %s113, %s114
      %p126 = scmp.eq.s32.totalorder %s20, 1
      %p127 = por %p125, %p126
      %p129 = scmp.ne.s32.totalorder %s114, %s128
      %p130 = scmp.eq.s32.totalorder %s20, 0
      %p131 = por %p129, %p130
      %s133 = sadd.s32 %s132, 1
      %p136 = scmp.eq.s32.totalorder %s14, 1
      %p137 = scmp.ne.s32.totalorder %s132, %s134
      %p138 = scmp.eq.s32.totalorder %s14, 0
      %p139 = por %p137, %p138
      %p140 = scmp.ne.s32.totalorder %s132, %s134
      %p141 = scmp.eq.s32.totalorder %s19, 1
      %p142 = por %p140, %p141
      %p143 = scmp.ne.s32.totalorder %s134, %s135
      %p144 = scmp.eq.s32.totalorder %s19, 0
      %p145 = por %p143, %p144
      %p146 = scmp.ne.s32.totalorder %s134, %s135
      %p147 = scmp.eq.s32.totalorder %s20, 1
      %p148 = por %p146, %p147
      %p150 = scmp.ne.s32.totalorder %s135, %s149
      %p151 = scmp.eq.s32.totalorder %s20, 0
      %p152 = por %p150, %p151
      %s154 = sadd.s32 %s153, 1
      %p157 = scmp.eq.s32.totalorder %s14, 1
      %p158 = scmp.ne.s32.totalorder %s153, %s155
      %p159 = scmp.eq.s32.totalorder %s14, 0
      %p160 = por %p158, %p159
      %p161 = scmp.ne.s32.totalorder %s153, %s155
      %p162 = scmp.eq.s32.totalorder %s19, 1
      %p163 = por %p161, %p162
      %p164 = scmp.ne.s32.totalorder %s155, %s156
      %p165 = scmp.eq.s32.totalorder %s19, 0
      %p166 = por %p164, %p165
      %p167 = scmp.ne.s32.totalorder %s155, %s156
      %p168 = scmp.eq.s32.totalorder %s20, 1
      %p169 = por %p167, %p168
      %p171 = scmp.ne.s32.totalorder %s156, %s170
      %p172 = scmp.eq.s32.totalorder %s20, 0
      %p173 = por %p171, %p172
      %s175 = sadd.s32 %s174, 1
      %p178 = scmp.eq.s32.totalorder %s14, 1
      %p179 = scmp.ne.s32.totalorder %s174, %s176
      %p180 = scmp.eq.s32.totalorder %s14, 0
      %p181 = por %p179, %p180
      %p182 = scmp.ne.s32.totalorder %s174, %s176
      %p183 = scmp.eq.s32.totalorder %s19, 1
      %p184 = por %p182, %p183
      %p185 = scmp.ne.s32.totalorder %s176, %s177
      %p186 = scmp.eq.s32.totalorder %s19, 0
      %p187 = por %p185, %p186
      %p188 = scmp.ne.s32.totalorder %s176, %s177
      %p189 = scmp.eq.s32.totalorder %s20, 1
      %p190 = por %p188, %p189
      %p192 = scmp.ne.s32.totalorder %s177, %s191
      %p193 = scmp.eq.s32.totalorder %s20, 0
      %p194 = por %p192, %p193
      %s195 = ssub.s32 %s14, %s21
      %p196 = scmp.eq.s32.totalorder %s195, 0
      %s198 = sadd.s32 %s197, 1
      %s199 = scalar_select %p196, %s197, %s198
      %p202 = pneg %p196
      %p203 = scmp.eq.s32.totalorder %s14, 1
      %p204 = por %p202, %p203
      %p205 = scmp.ne.s32.totalorder %s197, %s200
      %p206 = scmp.eq.s32.totalorder %s14, 0
      %p207 = por %p205, %p206
      %p208 = scmp.ne.s32.totalorder %s197, %s200
      %p209 = scmp.eq.s32.totalorder %s19, 1
      %p210 = por %p208, %p209
      %p211 = scmp.ne.s32.totalorder %s200, %s201
      %p212 = scmp.eq.s32.totalorder %s19, 0
      %p213 = por %p211, %p212
      %p214 = scmp.ne.s32.totalorder %s200, %s201
      %p215 = scmp.eq.s32.totalorder %s20, 1
      %p216 = por %p214, %p215
      %p218 = scmp.ne.s32.totalorder %s201, %s217
      %p219 = scmp.eq.s32.totalorder %s20, 0
      %p220 = por %p218, %p219
      %p221 = scmp.le.s32.totalorder 1, %s14
      %p222 = scmp.lt.s32.totalorder %s14, 3
      %p223 = pnand %p221, %p222
      %p224 = pneg %p223
      // Predicated region
      $region9: #{cnn_forward.1} parent=5 // pred_check
        _
      $region10: #{cnn_forward.1} parent=5 // pred_check_branch
        %226 = sbr.rel (%p223) target = $region12
      $region11: #{cnn_forward.1} parent=5 // pred_region
        %s227 = ssub.s32 %s14, 1
        // Predicated region
        $region13: #{cnn_forward.1} parent=11 // pred_check
          %p228 = pneg %p61
        $region14: #{cnn_forward.1} parent=11 // pred_check_branch
          %230 = sbr.rel (%p228) target = $region16
        $region15: #{cnn_forward.1} parent=11 // pred_region
          _
        $region16: #{cnn_forward.1} parent=11 // pred_fallthru
          _
        // Predicated region
        $region17: #{cnn_forward.1} parent=11 // pred_check
          %p231 = pneg %p82
        $region18: #{cnn_forward.1} parent=11 // pred_check_branch
          %233 = sbr.rel (%p231) target = $region20
        $region19: #{cnn_forward.1} parent=11 // pred_region
          _
        $region20: #{cnn_forward.1} parent=11 // pred_fallthru
          _
        // Predicated region
        $region21: #{cnn_forward.1} parent=11 // pred_check
          %p234 = pneg %p103
        $region22: #{cnn_forward.1} parent=11 // pred_check_branch
          %236 = sbr.rel (%p234) target = $region24
        $region23: #{cnn_forward.1} parent=11 // pred_region
          _
        $region24: #{cnn_forward.1} parent=11 // pred_fallthru
          _
        // Predicated region
        $region25: #{cnn_forward.1} parent=11 // pred_check
          %p237 = pneg %p124
        $region26: #{cnn_forward.1} parent=11 // pred_check_branch
          %239 = sbr.rel (%p237) target = $region28
        $region27: #{cnn_forward.1} parent=11 // pred_region
          _
        $region28: #{cnn_forward.1} parent=11 // pred_fallthru
          _
        // Predicated region
        $region29: #{cnn_forward.1} parent=11 // pred_check
          %p240 = pneg %p145
        $region30: #{cnn_forward.1} parent=11 // pred_check_branch
          %242 = sbr.rel (%p240) target = $region32
        $region31: #{cnn_forward.1} parent=11 // pred_region
          _
        $region32: #{cnn_forward.1} parent=11 // pred_fallthru
          _
        // Predicated region
        $region33: #{cnn_forward.1} parent=11 // pred_check
          %p243 = pneg %p166
        $region34: #{cnn_forward.1} parent=11 // pred_check_branch
          %245 = sbr.rel (%p243) target = $region36
        $region35: #{cnn_forward.1} parent=11 // pred_region
          _
        $region36: #{cnn_forward.1} parent=11 // pred_fallthru
          _
        // Predicated region
        $region37: #{cnn_forward.1} parent=11 // pred_check
          %p246 = pneg %p187
        $region38: #{cnn_forward.1} parent=11 // pred_check_branch
          %248 = sbr.rel (%p246) target = $region40
        $region39: #{cnn_forward.1} parent=11 // pred_region
          _
        $region40: #{cnn_forward.1} parent=11 // pred_fallthru
          _
      $region12: #{cnn_forward.1} parent=5 // pred_fallthru
        _
      %p249 = scmp.lt.s32.totalorder %s14, 2
      // Predicated region
      $region41: #{cnn_forward.1} parent=5 // pred_check
        %p250 = pneg %p249
      $region42: #{cnn_forward.1} parent=5 // pred_check_branch
        %252 = sbr.rel (%p250) target = $region44
      $region43: #{cnn_forward.1} parent=5 // pred_region
        // Predicated region
        $region45: #{cnn_forward.1} parent=43 // pred_check
          %p253 = pneg %p34
        $region46: #{cnn_forward.1} parent=43 // pred_check_branch
          %255 = sbr.rel (%p253) target = $region48
        $region47: #{cnn_forward.1} parent=43 // pred_region
          %s256 = sand.u32 %s24, 1
          %s257 = sand.u32 %s24, 1
          %s258 = smul.addr %s257, 24
          %s259 = scalar_lea.vmem [#allocation2], %s258
          %s260 = smul.addr %s14, 8
          %s261 = scalar_lea.vmem %s0, %s260
          // Predicated region
          $region49: #{cnn_forward.1} parent=47 // pred_check
            _
          $region50: #{cnn_forward.1} parent=47 // pred_check_branch
            %263 = sbr.rel (0) target = $region52
          $region51: #{cnn_forward.1} parent=47 // pred_region
            // Predicated region
            $region53: #{cnn_forward.1} parent=51 // pred_check
              _
            $region54: #{cnn_forward.1} parent=51 // pred_check_branch
              %265 = sbr.rel (0) target = $region56
            $region55: #{cnn_forward.1} parent=51 // pred_region
              // Predicated region
              $region68: #{cnn_forward.1} parent=55 // pred_check
                _
              $region69: #{cnn_forward.1} parent=55 // pred_check_branch
                %285 = sbr.rel (0) target = $region71
              $region70: #{cnn_forward.1} parent=55 // pred_region
                loop: start=0, step=1, limit=1
                $region72: #{cnn_forward.1} parent=70 // loop_pre_header
                  _
                $region73: #{cnn_forward.1} parent=70 // loop_header
                  %s287 = sphi 0, %s291
                  %p288 = scmp.ge.s32.totalorder %s287, 1
                  %s292 = sphi %s261, %s261
                  %s293 = sphi %s259, %s259
                $region74: #{cnn_forward.1} parent=70 // loop_header_branch
                  %290 = sbr.rel (%p288) target = $region78
                $region75: #{cnn_forward.1} parent=70 // loop_body
                  %v294 = vld [vmem:[%s292] sm:$0xff]
                  %295 = vst [vmem:[%s293] sm:$0xff] %v294
                  %v296 = vld [vmem:[%s292 + $0x10] sm:$0xff]
                  %297 = vst [vmem:[%s293 + $0x8] sm:$0xff] %v296
                  %v298 = vld [vmem:[%s292 + $0x20] sm:$0xff]
                  %299 = vst [vmem:[%s293 + $0x10] sm:$0xff] %v298
                $region76: #{cnn_forward.1} parent=70 // loop_footer
                  %s291 = sadd.s32 1, %s287
                $region77: #{cnn_forward.1} parent=70 // loop_footer_branch
                  %286 = sbr.rel target = $region73
                $region78: #{cnn_forward.1} parent=70 // loop_exit
                  _
              $region71: #{cnn_forward.1} parent=55 // pred_fallthru
                _
              // Predicated region
              $region79: #{cnn_forward.1} parent=55 // pred_check
                _
              $region80: #{cnn_forward.1} parent=55 // pred_check_branch
                %301 = sbr.rel target = $region82
              $region81: #{cnn_forward.1} parent=55 // pred_region
                _
              $region82: #{cnn_forward.1} parent=55 // pred_fallthru
                _
            $region56: #{cnn_forward.1} parent=51 // pred_fallthru
              _
            // Predicated region
            $region57: #{cnn_forward.1} parent=51 // pred_check
              _
            $region58: #{cnn_forward.1} parent=51 // pred_check_branch
              %267 = sbr.rel target = $region60
            $region59: #{cnn_forward.1} parent=51 // pred_region
              %s269 = ssub.s32 256, 1
              loop: start=0, step=1, limit=1
              $region61: #{cnn_forward.1} parent=59 // loop_pre_header
                _
              $region62: #{cnn_forward.1} parent=59 // loop_header
                %s271 = sphi 0, %s275
                %p272 = scmp.ge.s32.totalorder %s271, 1
                %s276 = sphi %s261, %s261
                %s277 = sphi %s259, %s259
              $region63: #{cnn_forward.1} parent=59 // loop_header_branch
                %274 = sbr.rel (%p272) target = $region67
              $region64: #{cnn_forward.1} parent=59 // loop_body
                %v278 = vld [vmem:[%s276] sm:%s269]
                %279 = vst [vmem:[%s277] sm:%s269] %v278
                %v280 = vld [vmem:[%s276 + $0x10] sm:%s269]
                %281 = vst [vmem:[%s277 + $0x8] sm:%s269] %v280
                %v282 = vld [vmem:[%s276 + $0x20] sm:%s269]
                %283 = vst [vmem:[%s277 + $0x10] sm:%s269] %v282
              $region65: #{cnn_forward.1} parent=59 // loop_footer
                %s275 = sadd.s32 1, %s271
              $region66: #{cnn_forward.1} parent=59 // loop_footer_branch
                %270 = sbr.rel target = $region62
              $region67: #{cnn_forward.1} parent=59 // loop_exit
                _
            $region60: #{cnn_forward.1} parent=51 // pred_fallthru
              _
          $region52: #{cnn_forward.1} parent=47 // pred_fallthru
            _
          %302 = vnop
        $region48: #{cnn_forward.1} parent=43 // pred_fallthru
          _
      $region44: #{cnn_forward.1} parent=5 // pred_fallthru
        _
      %p303 = scmp.le.s32.totalorder 1, %s14
      %p304 = scmp.lt.s32.totalorder %s14, 3
      %p305 = pnand %p303, %p304
      %p306 = pneg %p305
      // Predicated region
      $region83: #{cnn_forward.1} parent=5 // pred_check
        _
      $region84: #{cnn_forward.1} parent=5 // pred_check_branch
        %308 = sbr.rel (%p305) target = $region86
      $region85: #{cnn_forward.1} parent=5 // pred_region
        %s309 = ssub.s32 %s14, 1
        %s310 = sand.u32 %s27, 1
        %s311 = sand.u32 %s27, 1
        %s312 = smul.addr %s311, 24
        %s313 = scalar_lea.vmem [#allocation2], %s312
        // Predicated region
        $region87: #{cnn_forward.1} parent=85 // pred_check
          %p314 = pneg %p40
        $region88: #{cnn_forward.1} parent=85 // pred_check_branch
          %316 = sbr.rel (%p314) target = $region90
        $region89: #{cnn_forward.1} parent=85 // pred_region
          _
        $region90: #{cnn_forward.1} parent=85 // pred_fallthru
          _
        %s317 = sand.u32 %s27, 1
        %s318 = sand.u32 %s27, 1
        %s319 = smul.addr %s318, 24
        %s320 = scalar_lea.vmem [#allocation2], %s319
        %p321 = pneg %p40
        %p322 = pneg %p37
        %p323 = pneg %p61
        %p324 = pneg %p58
        %p325 = pneg %p82
        %p326 = pneg %p79
        %p327 = pneg %p103
        %p328 = pneg %p100
        %p329 = pneg %p124
        %p330 = pneg %p121
        %p331 = pneg %p145
        %p332 = pneg %p142
        %p333 = pneg %p166
        %p334 = pneg %p163
        %p335 = pneg %p187
        %p336 = pneg %p184
        %p337 = pneg %p213
        %p338 = pneg %p210
        %p339 = scmp.lt.s32.totalorder %s19, 1
        %s340 = scalar_select %p339, %s19, 1
        %s341 = smul.addr %s340, 8
        %s342 = scalar_lea.vmem %s8, %s341
        %p343 = scmp.lt.s32.totalorder %s19, 1
        %s344 = scalar_select %p343, %s19, 1
        %s345 = smul.addr %s344, 8
        %s346 = scalar_lea.vmem %s8, %s345
        %v348 = vld [vmem:[%s1] sm:$0x1]
        %v349 = vld [vmem:[%s1 + $0x1] sm:$0x1]
        %v350 = vld [vmem:[%s313] sm:$0xff]
        %v351 = vld [vmem:[%s313 + $0x8] sm:$0xff]
        %v352 = vld [vmem:[%s313 + $0x10] sm:$0xf]
        %v353 = vld [vmem:[%s2] sm:$0xf]
        %v354 = vld [vmem:[%s2 + $0x4] sm:$0xf]
        %v355 = vld [vmem:[%s2 + $0x8] sm:$0xf]
        %v356 = vld [vmem:[%s2 + $0xc] sm:$0xf]
        %357 = vrot.lane.b32.xlu0 %v350, 1
        %v358 = vpop.permute.xlu0 %357
        %359 = vrot.lane.b32.xlu0 %v351, 1
        %v360 = vpop.permute.xlu0 %359
        %361 = vrot.lane.b32.xlu0 %v352, 1
        %v362 = vpop.permute.xlu0 %361
        %v363 = vperm.slane %v348, 0
        %v364 = vmul.f32 %v358, %v363
        %v365 = vmul.f32 %v360, %v363
        %v366 = vmul.f32 %v362, %v363
        %v367 = vpack.c.bf16 %v365, %v364
        %v368 = vpack.c.bf16 %v366, %v366
        %s369 = scalar_lea.vmem %s2, 16
        %v370 = vld [vmem:[%s369] sm:$0xf]
        %v371 = vld [vmem:[%s369 + $0x4] sm:$0xf]
        %v372 = vld [vmem:[%s369 + $0x8] sm:$0xf]
        %v373 = vld [vmem:[%s369 + $0xc] sm:$0xf]
        %v374 = vpack.c.bf16 %v351, %v350
        %v375 = vpack.c.bf16 %v352, %v352
        %v380 = vunpack.c.l.b16 %v370
        %v381 = vunpack.c.l.b16 %v371
        %v382 = vunpack.c.l.b16 %v372
        %v383 = vunpack.c.l.b16 %v373
        %v384 = vpack.c.b16 %v381, %v380
        %v385 = vpack.c.b16 %v383, %v382
        %vm386 = vcmask 162816
        %v388 = vsel %vm386, %v384, 0
        %v391 = vsel %vm386, %v385, 0
        %vm393 = vcmask 1041408
        %v395 = vsel %vm393, %v375, 0
        %397 = vmatpush.bf16.msra.mxu0 0
        %398 = vmatpush.bf16.msra.mxu0 0
        %399 = vmatpush.bf16.msra.mxu0 0
        %400 = vmatpush.bf16.msra.mxu0 0
        %401 = vmatpush.bf16.msra.mxu0 0
        %402 = vmatpush.bf16.msra.mxu0 0
        %403 = vmatpush.bf16.msra.mxu0 %v395
        %404 = vmatpush.bf16.msra.mxu0 %v374
        %405 = vmatmul.bf16.gmra.mxu0 %v388
        %v406 = vpop.f32.mrf.mxu0
        %v407 = vadd.f32 0.0, %v406
        %v408 = vpop.f32.mrf.mxu0
        %v409 = vadd.f32 0.0, %v408
        %410 = vmatmul.bf16.gmra.mxu0 %v391
        %v411 = vpop.f32.mrf.mxu0
        %v412 = vadd.f32 0.0, %v411
        %v413 = vpop.f32.mrf.mxu0
        %v414 = vadd.f32 0.0, %v413
        %415 = vdwg.mxu0
        %v420 = vunpack.c.l.b16 %v353
        %v421 = vunpack.c.l.b16 %v354
        %v422 = vunpack.c.l.b16 %v355
        %v423 = vunpack.c.l.b16 %v356
        %v424 = vpack.c.b16 %v421, %v420
        %v425 = vpack.c.b16 %v423, %v422
        %v427 = vsel %vm386, %v424, 0
        %v430 = vsel %vm386, %v425, 0
        %v433 = vsel %vm393, %v368, 0
        %435 = vmatpush.bf16.msra.mxu0 0
        %436 = vmatpush.bf16.msra.mxu0 0
        %437 = vmatpush.bf16.msra.mxu0 0
        %438 = vmatpush.bf16.msra.mxu0 0
        %439 = vmatpush.bf16.msra.mxu0 0
        %440 = vmatpush.bf16.msra.mxu0 0
        %441 = vmatpush.bf16.msra.mxu0 %v433
        %442 = vmatpush.bf16.msra.mxu0 %v367
        %443 = vmatmul.bf16.gmra.mxu0 %v427
        %v444 = vpop.f32.mrf.mxu0
        %v445 = vadd.f32 %v407, %v444
        %v446 = vpop.f32.mrf.mxu0
        %v447 = vadd.f32 %v409, %v446
        %448 = vmatmul.bf16.gmra.mxu0 %v430
        %v449 = vpop.f32.mrf.mxu0
        %v450 = vadd.f32 %v412, %v449
        %v451 = vpop.f32.mrf.mxu0
        %v452 = vadd.f32 %v414, %v451
        %453 = vdwg.mxu0
        %s454 = scalar_lea.vmem %s2, 32
        %v455 = vld [vmem:[%s454] sm:$0xf]
        %v456 = vld [vmem:[%s454 + $0x4] sm:$0xf]
        %v457 = vld [vmem:[%s454 + $0x8] sm:$0xf]
        %v458 = vld [vmem:[%s454 + $0xc] sm:$0xf]
        %459 = vrot.lane.b32.xlu0 %v350, 127
        %v460 = vpop.permute.xlu0 %459
        %461 = vrot.lane.b32.xlu0 %v351, 127
        %v462 = vpop.permute.xlu0 %461
        %463 = vrot.lane.b32.xlu0 %v352, 127
        %v464 = vpop.permute.xlu0 %463
        %v465 = vperm.slane %v349, 0
        %v466 = vmul.f32 %v460, %v465
        %v467 = vmul.f32 %v462, %v465
        %v468 = vmul.f32 %v464, %v465
        %v469 = vpack.c.bf16 %v467, %v466
        %v470 = vpack.c.bf16 %v468, %v468
        %v475 = vunpack.c.l.b16 %v455
        %v476 = vunpack.c.l.b16 %v456
        %v477 = vunpack.c.l.b16 %v457
        %v478 = vunpack.c.l.b16 %v458
        %v479 = vpack.c.b16 %v476, %v475
        %v480 = vpack.c.b16 %v478, %v477
        %v482 = vsel %vm386, %v479, 0
        %v485 = vsel %vm386, %v480, 0
        %v488 = vsel %vm393, %v470, 0
        %490 = vmatpush.bf16.msra.mxu0 0
        %491 = vmatpush.bf16.msra.mxu0 0
        %492 = vmatpush.bf16.msra.mxu0 0
        %493 = vmatpush.bf16.msra.mxu0 0
        %494 = vmatpush.bf16.msra.mxu0 0
        %495 = vmatpush.bf16.msra.mxu0 0
        %496 = vmatpush.bf16.msra.mxu0 %v488
        %497 = vmatpush.bf16.msra.mxu0 %v469
        %498 = vmatmul.bf16.gmra.mxu0 %v482
        %v499 = vpop.f32.mrf.mxu0
        %v500 = vadd.f32 0.0, %v499
        %v501 = vpop.f32.mrf.mxu0
        %v502 = vadd.f32 0.0, %v501
        %503 = vmatmul.bf16.gmra.mxu0 %v485
        %v504 = vpop.f32.mrf.mxu0
        %v505 = vadd.f32 0.0, %v504
        %v506 = vpop.f32.mrf.mxu0
        %v507 = vadd.f32 0.0, %v506
        %508 = vdwg.mxu0
        %v509 = vadd.f32 %v445, %v500
        %v510 = vadd.f32 %v447, %v502
        %v511 = vadd.f32 %v450, %v505
        %v512 = vadd.f32 %v452, %v507
        %v513 = vld [vmem:[%s3] sm:$0xff]
        %v514 = vld [vmem:[%s3 + $0x8] sm:$0xff]
        %v515 = vld [vmem:[%s3 + $0x10] sm:$0xff]
        %v516 = vld [vmem:[%s3 + $0x18] sm:$0xff]
        %518 = vset.pattern.permute.xlu0 0
        %519 = vperm.xlu0 %518, %v513
        %v520 = vpop.permute.xlu0 %519
        %523 = vset.pattern.permute.xlu0 0
        %524 = vperm.xlu0 %523, %v514
        %v525 = vpop.permute.xlu0 %524
        %528 = vset.pattern.permute.xlu0 0
        %529 = vperm.xlu0 %528, %v515
        %v530 = vpop.permute.xlu0 %529
        %533 = vset.pattern.permute.xlu0 0
        %534 = vperm.xlu0 %533, %v516
        %v535 = vpop.permute.xlu0 %534
        %v537 = vadd.f32 %v509, %v520
        %v538 = vadd.f32 %v510, %v525
        %v539 = vadd.f32 %v511, %v530
        %v540 = vadd.f32 %v512, %v535
        %v541 = vld [vmem:[%s4] sm:$0xf]
        %v542 = vld [vmem:[%s4 + $0x4] sm:$0xf]
        %v543 = vld [vmem:[%s4 + $0x8] sm:$0xf]
        %v544 = vld [vmem:[%s4 + $0xc] sm:$0xf]
        %545 = vrot.lane.b32.xlu0 %v537, 1
        %v546 = vpop.permute.xlu0 %545
        %547 = vrot.lane.b32.xlu0 %v538, 1
        %v548 = vpop.permute.xlu0 %547
        %549 = vrot.lane.b32.xlu0 %v539, 1
        %v550 = vpop.permute.xlu0 %549
        %551 = vrot.lane.b32.xlu0 %v540, 1
        %v552 = vpop.permute.xlu0 %551
        %v553 = vmul.f32 %v546, %v363
        %v554 = vmul.f32 %v548, %v363
        %v555 = vmul.f32 %v550, %v363
        %v556 = vmul.f32 %v552, %v363
        %v557 = vpack.c.bf16 %v553, %v553
        %v558 = vpack.c.bf16 %v554, %v554
        %v559 = vpack.c.bf16 %v555, %v555
        %v560 = vpack.c.bf16 %v556, %v556
        %v561 = vpack.c.bf16 %v537, %v537
        %v562 = vpack.c.bf16 %v538, %v538
        %v563 = vpack.c.bf16 %v539, %v539
        %v564 = vpack.c.bf16 %v540, %v540
        %565 = vrot.lane.b32.xlu0 %v537, 127
        %v566 = vpop.permute.xlu0 %565
        %567 = vrot.lane.b32.xlu0 %v538, 127
        %v568 = vpop.permute.xlu0 %567
        %569 = vrot.lane.b32.xlu0 %v539, 127
        %v570 = vpop.permute.xlu0 %569
        %571 = vrot.lane.b32.xlu0 %v540, 127
        %v572 = vpop.permute.xlu0 %571
        %v573 = vmul.f32 %v566, %v465
        %v574 = vmul.f32 %v568, %v465
        %v575 = vmul.f32 %v570, %v465
        %v576 = vmul.f32 %v572, %v465
        %v577 = vpack.c.bf16 %v573, %v573
        %v578 = vpack.c.bf16 %v574, %v574
        %v579 = vpack.c.bf16 %v575, %v575
        %v580 = vpack.c.bf16 %v576, %v576
        %v585 = vunpack.c.l.b16 %v557
        %v586 = vunpack.c.l.b16 %v558
        %v587 = vunpack.c.l.b16 %v559
        %v588 = vunpack.c.l.b16 %v560
        %v589 = vpack.c.b16 %v586, %v585
        %v590 = vpack.c.b16 %v588, %v587
        %v597 = vunpack.c.l.b16 %v561
        %v598 = vunpack.c.l.b16 %v562
        %v599 = vunpack.c.l.b16 %v563
        %v600 = vunpack.c.l.b16 %v564
        %v601 = vpack.c.b16 %v598, %v597
        %v602 = vpack.c.b16 %v600, %v599
        %v609 = vunpack.c.l.b16 %v577
        %v610 = vunpack.c.l.b16 %v578
        %v611 = vunpack.c.l.b16 %v579
        %v612 = vunpack.c.l.b16 %v580
        %v613 = vpack.c.b16 %v610, %v609
        %v614 = vpack.c.b16 %v612, %v611
        %v617 = vld [vmem:[%s5] sm:$0xff]
        %v618 = vld [vmem:[%s5 + $0x8] sm:$0xff]
        %v619 = vld [vmem:[%s5 + $0x10] sm:$0xff]
        %v620 = vld [vmem:[%s5 + $0x18] sm:$0xff]
        %622 = vset.pattern.permute.xlu0 0
        %623 = vperm.xlu0 %622, %v617
        %v624 = vpop.permute.xlu0 %623
        %627 = vset.pattern.permute.xlu0 0
        %628 = vperm.xlu0 %627, %v618
        %v629 = vpop.permute.xlu0 %628
        %632 = vset.pattern.permute.xlu0 0
        %633 = vperm.xlu0 %632, %v619
        %v634 = vpop.permute.xlu0 %633
        %637 = vset.pattern.permute.xlu0 0
        %638 = vperm.xlu0 %637, %v620
        %v639 = vpop.permute.xlu0 %638
        %v645 = vunpack.c.l.b16 %v541
        %v646 = vunpack.c.l.b16 %v542
        %v647 = vunpack.c.l.b16 %v543
        %v648 = vunpack.c.l.b16 %v544
        %v649 = vpack.c.b16 %v646, %v645
        %v650 = vpack.c.b16 %v648, %v647
        %vm651 = vcmask 785408
        %v653 = vsel %vm651, %v649, 0
        %v656 = vsel %vm651, %v650, 0
        %658 = vmatpush.bf16.msra.mxu0 0
        %659 = vmatpush.bf16.msra.mxu0 0
        %660 = vmatpush.bf16.msra.mxu0 %v614
        %661 = vmatpush.bf16.msra.mxu0 %v613
        %662 = vmatpush.bf16.msra.mxu0 %v602
        %663 = vmatpush.bf16.msra.mxu0 %v601
        %664 = vmatpush.bf16.msra.mxu0 %v590
        %665 = vmatpush.bf16.msra.mxu0 %v589
        %666 = vmatmul.bf16.gmra.mxu0 %v653
        %v667 = vpop.f32.mrf.mxu0
        %v668 = vadd.f32 %v624, %v667
        %v669 = vpop.f32.mrf.mxu0
        %v670 = vadd.f32 %v629, %v669
        %671 = vmatmul.bf16.gmra.mxu0 %v656
        %v672 = vpop.f32.mrf.mxu0
        %v673 = vadd.f32 %v634, %v672
        %v674 = vpop.f32.mrf.mxu0
        %v675 = vadd.f32 %v639, %v674
        %676 = vdwg.mxu0
        %v677 = vmax.f32 %v668, 0.0
        %v678 = vmax.f32 %v670, 0.0
        %v679 = vmax.f32 %v673, 0.0
        %v680 = vmax.f32 %v675, 0.0
        %s681 = scalar_lea.vmem %s4, 16
        %v682 = vld [vmem:[%s681] sm:$0xf]
        %v683 = vld [vmem:[%s681 + $0x4] sm:$0xf]
        %v684 = vld [vmem:[%s681 + $0x8] sm:$0xf]
        %v685 = vld [vmem:[%s681 + $0xc] sm:$0xf]
        %686 = vrot.lane.b32.xlu0 %v677, 1
        %v687 = vpop.permute.xlu0 %686
        %688 = vrot.lane.b32.xlu0 %v678, 1
        %v689 = vpop.permute.xlu0 %688
        %690 = vrot.lane.b32.xlu0 %v679, 1
        %v691 = vpop.permute.xlu0 %690
        %692 = vrot.lane.b32.xlu0 %v680, 1
        %v693 = vpop.permute.xlu0 %692
        %v694 = vmul.f32 %v687, %v363
        %v695 = vmul.f32 %v689, %v363
        %v696 = vmul.f32 %v691, %v363
        %v697 = vmul.f32 %v693, %v363
        %v698 = vpack.c.bf16 %v694, %v694
        %v699 = vpack.c.bf16 %v695, %v695
        %v700 = vpack.c.bf16 %v696, %v696
        %v701 = vpack.c.bf16 %v697, %v697
        %v702 = vpack.c.bf16 %v677, %v677
        %v703 = vpack.c.bf16 %v678, %v678
        %v704 = vpack.c.bf16 %v679, %v679
        %v705 = vpack.c.bf16 %v680, %v680
        %706 = vrot.lane.b32.xlu0 %v677, 127
        %v707 = vpop.permute.xlu0 %706
        %708 = vrot.lane.b32.xlu0 %v678, 127
        %v709 = vpop.permute.xlu0 %708
        %710 = vrot.lane.b32.xlu0 %v679, 127
        %v711 = vpop.permute.xlu0 %710
        %712 = vrot.lane.b32.xlu0 %v680, 127
        %v713 = vpop.permute.xlu0 %712
        %v714 = vmul.f32 %v707, %v465
        %v715 = vmul.f32 %v709, %v465
        %v716 = vmul.f32 %v711, %v465
        %v717 = vmul.f32 %v713, %v465
        %v718 = vpack.c.bf16 %v714, %v714
        %v719 = vpack.c.bf16 %v715, %v715
        %v720 = vpack.c.bf16 %v716, %v716
        %v721 = vpack.c.bf16 %v717, %v717
        %v726 = vunpack.c.l.b16 %v698
        %v727 = vunpack.c.l.b16 %v699
        %v728 = vunpack.c.l.b16 %v700
        %v729 = vunpack.c.l.b16 %v701
        %v730 = vpack.c.b16 %v727, %v726
        %v731 = vpack.c.b16 %v729, %v728
        %v738 = vunpack.c.l.b16 %v702
        %v739 = vunpack.c.l.b16 %v703
        %v740 = vunpack.c.l.b16 %v704
        %v741 = vunpack.c.l.b16 %v705
        %v742 = vpack.c.b16 %v739, %v738
        %v743 = vpack.c.b16 %v741, %v740
        %v750 = vunpack.c.l.b16 %v718
        %v751 = vunpack.c.l.b16 %v719
        %v752 = vunpack.c.l.b16 %v720
        %v753 = vunpack.c.l.b16 %v721
        %v754 = vpack.c.b16 %v751, %v750
        %v755 = vpack.c.b16 %v753, %v752
        %s758 = scalar_lea.vmem %s5, 32
        %v759 = vld [vmem:[%s758] sm:$0xff]
        %v760 = vld [vmem:[%s758 + $0x8] sm:$0xff]
        %v761 = vld [vmem:[%s758 + $0x10] sm:$0xff]
        %v762 = vld [vmem:[%s758 + $0x18] sm:$0xff]
        %764 = vset.pattern.permute.xlu0 0
        %765 = vperm.xlu0 %764, %v759
        %v766 = vpop.permute.xlu0 %765
        %769 = vset.pattern.permute.xlu0 0
        %770 = vperm.xlu0 %769, %v760
        %v771 = vpop.permute.xlu0 %770
        %774 = vset.pattern.permute.xlu0 0
        %775 = vperm.xlu0 %774, %v761
        %v776 = vpop.permute.xlu0 %775
        %779 = vset.pattern.permute.xlu0 0
        %780 = vperm.xlu0 %779, %v762
        %v781 = vpop.permute.xlu0 %780
        %v787 = vunpack.c.l.b16 %v682
        %v788 = vunpack.c.l.b16 %v683
        %v789 = vunpack.c.l.b16 %v684
        %v790 = vunpack.c.l.b16 %v685
        %v791 = vpack.c.b16 %v788, %v787
        %v792 = vpack.c.b16 %v790, %v789
        %v794 = vsel %vm651, %v791, 0
        %v797 = vsel %vm651, %v792, 0
        %799 = vmatpush.bf16.msra.mxu0 0
        %800 = vmatpush.bf16.msra.mxu0 0
        %801 = vmatpush.bf16.msra.mxu0 %v755
        %802 = vmatpush.bf16.msra.mxu0 %v754
        %803 = vmatpush.bf16.msra.mxu0 %v743
        %804 = vmatpush.bf16.msra.mxu0 %v742
        %805 = vmatpush.bf16.msra.mxu0 %v731
        %806 = vmatpush.bf16.msra.mxu0 %v730
        %807 = vmatmul.bf16.gmra.mxu0 %v794
        %v808 = vpop.f32.mrf.mxu0
        %v809 = vadd.f32 %v766, %v808
        %v810 = vpop.f32.mrf.mxu0
        %v811 = vadd.f32 %v771, %v810
        %812 = vmatmul.bf16.gmra.mxu0 %v797
        %v813 = vpop.f32.mrf.mxu0
        %v814 = vadd.f32 %v776, %v813
        %v815 = vpop.f32.mrf.mxu0
        %v816 = vadd.f32 %v781, %v815
        %817 = vdwg.mxu0
        %v818 = vmax.f32 %v809, 0.0
        %v819 = vmax.f32 %v811, 0.0
        %v820 = vmax.f32 %v814, 0.0
        %v821 = vmax.f32 %v816, 0.0
        %s822 = scalar_lea.vmem %s4, 32
        %v823 = vld [vmem:[%s822] sm:$0xf]
        %v824 = vld [vmem:[%s822 + $0x4] sm:$0xf]
        %v825 = vld [vmem:[%s822 + $0x8] sm:$0xf]
        %v826 = vld [vmem:[%s822 + $0xc] sm:$0xf]
        %827 = vrot.lane.b32.xlu0 %v818, 1
        %v828 = vpop.permute.xlu0 %827
        %829 = vrot.lane.b32.xlu0 %v819, 1
        %v830 = vpop.permute.xlu0 %829
        %831 = vrot.lane.b32.xlu0 %v820, 1
        %v832 = vpop.permute.xlu0 %831
        %833 = vrot.lane.b32.xlu0 %v821, 1
        %v834 = vpop.permute.xlu0 %833
        %v835 = vmul.f32 %v828, %v363
        %v836 = vmul.f32 %v830, %v363
        %v837 = vmul.f32 %v832, %v363
        %v838 = vmul.f32 %v834, %v363
        %v839 = vpack.c.bf16 %v835, %v835
        %v840 = vpack.c.bf16 %v836, %v836
        %v841 = vpack.c.bf16 %v837, %v837
        %v842 = vpack.c.bf16 %v838, %v838
        %v843 = vpack.c.bf16 %v818, %v818
        %v844 = vpack.c.bf16 %v819, %v819
        %v845 = vpack.c.bf16 %v820, %v820
        %v846 = vpack.c.bf16 %v821, %v821
        %847 = vrot.lane.b32.xlu0 %v818, 127
        %v848 = vpop.permute.xlu0 %847
        %849 = vrot.lane.b32.xlu0 %v819, 127
        %v850 = vpop.permute.xlu0 %849
        %851 = vrot.lane.b32.xlu0 %v820, 127
        %v852 = vpop.permute.xlu0 %851
        %853 = vrot.lane.b32.xlu0 %v821, 127
        %v854 = vpop.permute.xlu0 %853
        %v855 = vmul.f32 %v848, %v465
        %v856 = vmul.f32 %v850, %v465
        %v857 = vmul.f32 %v852, %v465
        %v858 = vmul.f32 %v854, %v465
        %v859 = vpack.c.bf16 %v855, %v855
        %v860 = vpack.c.bf16 %v856, %v856
        %v861 = vpack.c.bf16 %v857, %v857
        %v862 = vpack.c.bf16 %v858, %v858
        %v867 = vunpack.c.l.b16 %v839
        %v868 = vunpack.c.l.b16 %v840
        %v869 = vunpack.c.l.b16 %v841
        %v870 = vunpack.c.l.b16 %v842
        %v871 = vpack.c.b16 %v868, %v867
        %v872 = vpack.c.b16 %v870, %v869
        %v879 = vunpack.c.l.b16 %v843
        %v880 = vunpack.c.l.b16 %v844
        %v881 = vunpack.c.l.b16 %v845
        %v882 = vunpack.c.l.b16 %v846
        %v883 = vpack.c.b16 %v880, %v879
        %v884 = vpack.c.b16 %v882, %v881
        %v891 = vunpack.c.l.b16 %v859
        %v892 = vunpack.c.l.b16 %v860
        %v893 = vunpack.c.l.b16 %v861
        %v894 = vunpack.c.l.b16 %v862
        %v895 = vpack.c.b16 %v892, %v891
        %v896 = vpack.c.b16 %v894, %v893
        %s899 = scalar_lea.vmem %s5, 64
        %v900 = vld [vmem:[%s899] sm:$0xff]
        %v901 = vld [vmem:[%s899 + $0x8] sm:$0xff]
        %v902 = vld [vmem:[%s899 + $0x10] sm:$0xff]
        %v903 = vld [vmem:[%s899 + $0x18] sm:$0xff]
        %905 = vset.pattern.permute.xlu0 0
        %906 = vperm.xlu0 %905, %v900
        %v907 = vpop.permute.xlu0 %906
        %910 = vset.pattern.permute.xlu0 0
        %911 = vperm.xlu0 %910, %v901
        %v912 = vpop.permute.xlu0 %911
        %915 = vset.pattern.permute.xlu0 0
        %916 = vperm.xlu0 %915, %v902
        %v917 = vpop.permute.xlu0 %916
        %920 = vset.pattern.permute.xlu0 0
        %921 = vperm.xlu0 %920, %v903
        %v922 = vpop.permute.xlu0 %921
        %v928 = vunpack.c.l.b16 %v823
        %v929 = vunpack.c.l.b16 %v824
        %v930 = vunpack.c.l.b16 %v825
        %v931 = vunpack.c.l.b16 %v826
        %v932 = vpack.c.b16 %v929, %v928
        %v933 = vpack.c.b16 %v931, %v930
        %v935 = vsel %vm651, %v932, 0
        %v938 = vsel %vm651, %v933, 0
        %940 = vmatpush.bf16.msra.mxu0 0
        %941 = vmatpush.bf16.msra.mxu0 0
        %942 = vmatpush.bf16.msra.mxu0 %v896
        %943 = vmatpush.bf16.msra.mxu0 %v895
        %944 = vmatpush.bf16.msra.mxu0 %v884
        %945 = vmatpush.bf16.msra.mxu0 %v883
        %946 = vmatpush.bf16.msra.mxu0 %v872
        %947 = vmatpush.bf16.msra.mxu0 %v871
        %948 = vmatmul.bf16.gmra.mxu0 %v935
        %v949 = vpop.f32.mrf.mxu0
        %v950 = vadd.f32 %v907, %v949
        %v951 = vpop.f32.mrf.mxu0
        %v952 = vadd.f32 %v912, %v951
        %953 = vmatmul.bf16.gmra.mxu0 %v938
        %v954 = vpop.f32.mrf.mxu0
        %v955 = vadd.f32 %v917, %v954
        %v956 = vpop.f32.mrf.mxu0
        %v957 = vadd.f32 %v922, %v956
        %958 = vdwg.mxu0
        %v959 = vmax.f32 %v950, 0.0
        %v960 = vmax.f32 %v952, 0.0
        %v961 = vmax.f32 %v955, 0.0
        %v962 = vmax.f32 %v957, 0.0
        %s963 = scalar_lea.vmem %s4, 48
        %v964 = vld [vmem:[%s963] sm:$0xf]
        %v965 = vld [vmem:[%s963 + $0x4] sm:$0xf]
        %v966 = vld [vmem:[%s963 + $0x8] sm:$0xf]
        %v967 = vld [vmem:[%s963 + $0xc] sm:$0xf]
        %968 = vrot.lane.b32.xlu0 %v959, 1
        %v969 = vpop.permute.xlu0 %968
        %970 = vrot.lane.b32.xlu0 %v960, 1
        %v971 = vpop.permute.xlu0 %970
        %972 = vrot.lane.b32.xlu0 %v961, 1
        %v973 = vpop.permute.xlu0 %972
        %974 = vrot.lane.b32.xlu0 %v962, 1
        %v975 = vpop.permute.xlu0 %974
        %v976 = vmul.f32 %v969, %v363
        %v977 = vmul.f32 %v971, %v363
        %v978 = vmul.f32 %v973, %v363
        %v979 = vmul.f32 %v975, %v363
        %v980 = vpack.c.bf16 %v976, %v976
        %v981 = vpack.c.bf16 %v977, %v977
        %v982 = vpack.c.bf16 %v978, %v978
        %v983 = vpack.c.bf16 %v979, %v979
        %v984 = vpack.c.bf16 %v959, %v959
        %v985 = vpack.c.bf16 %v960, %v960
        %v986 = vpack.c.bf16 %v961, %v961
        %v987 = vpack.c.bf16 %v962, %v962
        %988 = vrot.lane.b32.xlu0 %v959, 127
        %v989 = vpop.permute.xlu0 %988
        %990 = vrot.lane.b32.xlu0 %v960, 127
        %v991 = vpop.permute.xlu0 %990
        %992 = vrot.lane.b32.xlu0 %v961, 127
        %v993 = vpop.permute.xlu0 %992
        %994 = vrot.lane.b32.xlu0 %v962, 127
        %v995 = vpop.permute.xlu0 %994
        %v996 = vmul.f32 %v989, %v465
        %v997 = vmul.f32 %v991, %v465
        %v998 = vmul.f32 %v993, %v465
        %v999 = vmul.f32 %v995, %v465
        %v1000 = vpack.c.bf16 %v996, %v996
        %v1001 = vpack.c.bf16 %v997, %v997
        %v1002 = vpack.c.bf16 %v998, %v998
        %v1003 = vpack.c.bf16 %v999, %v999
        %v1008 = vunpack.c.l.b16 %v980
        %v1009 = vunpack.c.l.b16 %v981
        %v1010 = vunpack.c.l.b16 %v982
        %v1011 = vunpack.c.l.b16 %v983
        %v1012 = vpack.c.b16 %v1009, %v1008
        %v1013 = vpack.c.b16 %v1011, %v1010
        %v1020 = vunpack.c.l.b16 %v984
        %v1021 = vunpack.c.l.b16 %v985
        %v1022 = vunpack.c.l.b16 %v986
        %v1023 = vunpack.c.l.b16 %v987
        %v1024 = vpack.c.b16 %v1021, %v1020
        %v1025 = vpack.c.b16 %v1023, %v1022
        %v1032 = vunpack.c.l.b16 %v1000
        %v1033 = vunpack.c.l.b16 %v1001
        %v1034 = vunpack.c.l.b16 %v1002
        %v1035 = vunpack.c.l.b16 %v1003
        %v1036 = vpack.c.b16 %v1033, %v1032
        %v1037 = vpack.c.b16 %v1035, %v1034
        %s1040 = scalar_lea.vmem %s5, 96
        %v1041 = vld [vmem:[%s1040] sm:$0xff]
        %v1042 = vld [vmem:[%s1040 + $0x8] sm:$0xff]
        %v1043 = vld [vmem:[%s1040 + $0x10] sm:$0xff]
        %v1044 = vld [vmem:[%s1040 + $0x18] sm:$0xff]
        %1046 = vset.pattern.permute.xlu0 0
        %1047 = vperm.xlu0 %1046, %v1041
        %v1048 = vpop.permute.xlu0 %1047
        %1051 = vset.pattern.permute.xlu0 0
        %1052 = vperm.xlu0 %1051, %v1042
        %v1053 = vpop.permute.xlu0 %1052
        %1056 = vset.pattern.permute.xlu0 0
        %1057 = vperm.xlu0 %1056, %v1043
        %v1058 = vpop.permute.xlu0 %1057
        %1061 = vset.pattern.permute.xlu0 0
        %1062 = vperm.xlu0 %1061, %v1044
        %v1063 = vpop.permute.xlu0 %1062
        %v1069 = vunpack.c.l.b16 %v964
        %v1070 = vunpack.c.l.b16 %v965
        %v1071 = vunpack.c.l.b16 %v966
        %v1072 = vunpack.c.l.b16 %v967
        %v1073 = vpack.c.b16 %v1070, %v1069
        %v1074 = vpack.c.b16 %v1072, %v1071
        %v1076 = vsel %vm651, %v1073, 0
        %v1079 = vsel %vm651, %v1074, 0
        %1081 = vmatpush.bf16.msra.mxu0 0
        %1082 = vmatpush.bf16.msra.mxu0 0
        %1083 = vmatpush.bf16.msra.mxu0 %v1037
        %1084 = vmatpush.bf16.msra.mxu0 %v1036
        %1085 = vmatpush.bf16.msra.mxu0 %v1025
        %1086 = vmatpush.bf16.msra.mxu0 %v1024
        %1087 = vmatpush.bf16.msra.mxu0 %v1013
        %1088 = vmatpush.bf16.msra.mxu0 %v1012
        %1089 = vmatmul.bf16.gmra.mxu0 %v1076
        %v1090 = vpop.f32.mrf.mxu0
        %v1091 = vadd.f32 %v1048, %v1090
        %v1092 = vpop.f32.mrf.mxu0
        %v1093 = vadd.f32 %v1053, %v1092
        %1094 = vmatmul.bf16.gmra.mxu0 %v1079
        %v1095 = vpop.f32.mrf.mxu0
        %v1096 = vadd.f32 %v1058, %v1095
        %v1097 = vpop.f32.mrf.mxu0
        %v1098 = vadd.f32 %v1063, %v1097
        %1099 = vdwg.mxu0
        %v1100 = vmax.f32 %v1091, 0.0
        %v1101 = vmax.f32 %v1093, 0.0
        %v1102 = vmax.f32 %v1096, 0.0
        %v1103 = vmax.f32 %v1098, 0.0
        %v1104 = vld [vmem:[%s6] sm:$0xf]
        %v1105 = vpack.c.bf16 %v1101, %v1100
        %v1106 = vpack.c.bf16 %v1103, %v1102
        %v1107 = vld [vmem:[%s7] sm:$0xff]
        %1109 = vset.pattern.permute.xlu0 0
        %1110 = vperm.xlu0 %1109, %v1107
        %v1111 = vpop.permute.xlu0 %1110
        %vm1113 = vcmask 261120
        %v1115 = vsel %vm1113, %v1104, 0
        %1117 = vmatpush.bf16.msra.mxu0 0
        %1118 = vmatpush.bf16.msra.mxu0 0
        %1119 = vmatpush.bf16.msra.mxu0 0
        %1120 = vmatpush.bf16.msra.mxu0 0
        %1121 = vmatpush.bf16.msra.mxu0 0
        %1122 = vmatpush.bf16.msra.mxu0 0
        %1123 = vmatpush.bf16.msra.mxu0 %v1106
        %1124 = vmatpush.bf16.msra.mxu0 %v1105
        %1125 = vmatmul.bf16.gmra.mxu0 %v1115
        %v1126 = vpop.f32.mrf.mxu0
        %v1127 = vadd.f32 %v1111, %v1126
        %v1128 = vpop.f32.mrf.mxu0
        %1129 = vdwg.mxu0
        %1130 = vst [vmem:[%s346] sm:$0xff] %v1127
        %p1131 = scmp.lt.s32.totalorder %s19, 1
        %s1132 = scalar_select %p1131, %s19, 1
        %s1133 = smul.addr %s1132, 8
        %s1134 = scalar_lea.vmem %s8, %s1133
        // Predicated region
        $region91: #{cnn_forward.1} parent=85 // pred_check
          %p1135 = pneg %p210
        $region92: #{cnn_forward.1} parent=85 // pred_check_branch
          %1137 = sbr.rel (%p1135) target = $region94
        $region93: #{cnn_forward.1} parent=85 // pred_region
          _
        $region94: #{cnn_forward.1} parent=85 // pred_fallthru
          _
      $region86: #{cnn_forward.1} parent=5 // pred_fallthru
        _
      %p1138 = scmp.le.s32.totalorder 2, %s14
      // Predicated region
      $region95: #{cnn_forward.1} parent=5 // pred_check
        %p1139 = pneg %p1138
      $region96: #{cnn_forward.1} parent=5 // pred_check_branch
        %1141 = sbr.rel (%p1139) target = $region98
      $region97: #{cnn_forward.1} parent=5 // pred_region
        %s1142 = ssub.s32 %s14, 2
        // Predicated region
        $region99: #{cnn_forward.1} parent=97 // pred_check
          %p1143 = pneg %p216
        $region100: #{cnn_forward.1} parent=97 // pred_check_branch
          %1145 = sbr.rel (%p1143) target = $region102
        $region101: #{cnn_forward.1} parent=97 // pred_region
          %p1146 = scmp.lt.s32.totalorder %s20, 1
          %s1147 = scalar_select %p1146, %s20, 1
          %s1148 = smul.addr %s1147, 8
          %s1149 = scalar_lea.vmem %s8, %s1148
        $region102: #{cnn_forward.1} parent=97 // pred_fallthru
          _
      $region98: #{cnn_forward.1} parent=5 // pred_fallthru
        _
    $region6: #{cnn_forward.1} parent=1 // loop_footer
      %s18 = sadd.s32 1, %s14
    $region7: #{cnn_forward.1} parent=1 // loop_footer_branch
      %13 = sbr.rel target = $region3
    $region8: #{cnn_forward.1} parent=1 // loop_exit
      _

</llo_original>
